<compile_context>
chip_gen: v5e
topology: v5e:2x2
jax: 0.10.0
libtpu: 0.0.40
codegen_flags: <defaults>
</compile_context>

<pallas_src>
import functools
import math

import jax
import jax.numpy as jnp
from jax import lax
from jax.experimental import pallas as pl
from jax.experimental.pallas import tpu as pltpu

_LANE = 128
_SUBLANE = 8


def _round_up(x, m):
    return ((x + m - 1) // m) * m


# --------------------------- kernel 1: fused QKV --------------------------- #
def _qkv_proj_kernel(x_ref, w_ref, q_ref, k_ref, v_ref, *, dp, scale):
    # x_ref: (tm, d_in), w_ref: (d_in, 3*dp) -> one fused MXU matmul.
    y = jnp.dot(x_ref[...], w_ref[...], preferred_element_type=jnp.float32)
    # Fold 1/sqrt(d_k) into Q here (O(rows*d)) instead of on the (S,S) scores.
    q_ref[...] = (y[:, :dp] * scale).astype(q_ref.dtype)
    k_ref[...] = y[:, dp:2 * dp].astype(k_ref.dtype)
    v_ref[...] = y[:, 2 * dp:].astype(v_ref.dtype)


# --------------- kernel 2: resident-K/V flash attention -------------------- #
def _flash_attn_kernel(q_ref, k_ref, v_ref, o_ref, m_ref, l_ref, acc_ref, *,
                       blk_kv, kv_valid):
    # q_ref: (blk_q, dp) pre-scaled; k_ref/v_ref: full (S_p, dp) resident in VMEM.
    m_ref[...] = jnp.full(m_ref.shape, -jnp.inf, dtype=jnp.float32)
    l_ref[...] = jnp.zeros(l_ref.shape, dtype=jnp.float32)
    acc_ref[...] = jnp.zeros(acc_ref.shape, dtype=jnp.float32)

    q = q_ref[...]

    n_full = kv_valid // blk_kv            # fully-valid kv tiles (static)
    tail = kv_valid - n_full * blk_kv      # valid keys in the padded tail tile

    def kv_block(k, v, mask_bound=None):
        # Q @ K^T contracting last axes — no explicit K transpose (XLU stays
        # free for the row reductions below).
        s = lax.dot_general(q, k, dimension_numbers=(((1,), (1,)), ((), ())),
                            preferred_element_type=jnp.float32)
        if mask_bound is not None:
            # Only the statically-known tail tile pays for the mask.
            kv_idx = lax.broadcasted_iota(jnp.int32, s.shape, 1)
            s = jnp.where(kv_idx < mask_bound, s, -jnp.inf)
        m_prev = m_ref[...]
        m_new = jnp.maximum(m_prev, jnp.max(s, axis=-1, keepdims=True))
        alpha = jnp.exp(m_prev - m_new)
        p = jnp.exp(s - m_new)
        l_ref[...] = alpha * l_ref[...] + jnp.sum(p, axis=-1, keepdims=True)
        acc_ref[...] = alpha * acc_ref[...] + jnp.dot(
            p.astype(v.dtype), v, preferred_element_type=jnp.float32)
        m_ref[...] = m_new

    if n_full > 0:
        def body(j, carry):
            start = pl.multiple_of(j * blk_kv, blk_kv)
            kv_block(k_ref[pl.ds(start, blk_kv), :],
                     v_ref[pl.ds(start, blk_kv), :])
            return carry
        lax.fori_loop(0, n_full, body, 0, unroll=(n_full <= 8))

    if tail > 0:
        start = n_full * blk_kv            # static
        kv_block(k_ref[pl.ds(start, blk_kv), :],
                 v_ref[pl.ds(start, blk_kv), :],
                 mask_bound=tail)

    inv_l = pl.reciprocal(l_ref[...], approx=False)   # accurate normalization
    o_ref[...] = (acc_ref[...] * inv_l).astype(o_ref.dtype)


def self_attention_v2(x, w_q, w_k, w_v, *, q_tile=512, kv_tile=512,
                      row_tile=1024, qkv_dtype=jnp.bfloat16):
    """x: (B, S, d_in); w_*: (d_in, d_out) (transposed torch Linear weights)."""
    B, S, d_in = x.shape
    d_out = w_q.shape[1]
    scale = 1.0 / math.sqrt(d_out)          # d_k == d_out in SelfAttention_v2

    dp = _round_up(d_out, _LANE)            # lane-dense head dim (>= 128)
    S8 = _round_up(S, _SUBLANE)
    blk_q = min(q_tile, S8)
    blk_kv = min(kv_tile, S8)
    S_p = _round_up(S, math.lcm(blk_q, blk_kv))
    n_q = S_p // blk_q
    qkv_item = jnp.dtype(qkv_dtype).itemsize
    x_item = x.dtype.itemsize

    x_p = jnp.pad(x, ((0, 0), (0, S_p - S), (0, 0))) if S_p != S else x

    # Fused QKV weight, padded to lane-dense multiples of 128 along d_out.
    pad_d = dp - d_out
    w_qkv = jnp.concatenate(
        [jnp.pad(w, ((0, 0), (0, pad_d))) for w in (w_q, w_k, w_v)], axis=1)
    # TODO(synk): for real model sizes (d_in*3*dp*4B approaching v7x's 64 MiB
    # VMEM) the fully-resident fused weight block must be tiled along N (or K
    # with an f32 accumulator); trivially fine at these shapes.

    # ---- kernel 1: fused, batch-flattened QKV projection -------------------
    rows = B * S_p
    tm = min(row_tile, rows)
    rows_p = _round_up(rows, tm)
    x_flat = x_p.reshape(rows, d_in)
    if rows_p != rows:
        x_flat = jnp.pad(x_flat, ((0, rows_p - rows), (0, 0)))

    qkv = pl.pallas_call(
        functools.partial(_qkv_proj_kernel, dp=dp, scale=scale),
        out_shape=(
            jax.ShapeDtypeStruct((rows_p, dp), qkv_dtype),
            jax.ShapeDtypeStruct((rows_p, dp), qkv_dtype),
            jax.ShapeDtypeStruct((rows_p, dp), qkv_dtype),
        ),
        grid_spec=pltpu.PrefetchScalarGridSpec(
            num_scalar_prefetch=0,
            grid=(rows_p // tm,),
            in_specs=[
                pl.BlockSpec((tm, d_in), lambda i: (i, 0)),
                # Constant index_map: weight fetched once, reused across rows.
                pl.BlockSpec((d_in, 3 * dp), lambda i: (0, 0)),
            ],
            out_specs=(
                pl.BlockSpec((tm, dp), lambda i: (i, 0)),
                pl.BlockSpec((tm, dp), lambda i: (i, 0)),
                pl.BlockSpec((tm, dp), lambda i: (i, 0)),
            ),
        ),
        compiler_params=pltpu.CompilerParams(
            dimension_semantics=("parallel",),
            vmem_limit_bytes=64 * 1024 * 1024,
        ),
        cost_estimate=pl.CostEstimate(
            flops=2 * rows_p * d_in * 3 * dp,
            transcendentals=0,
            bytes_accessed=(rows_p * d_in * x_item + d_in * 3 * dp * x_item
                            + 3 * rows_p * dp * qkv_item),
        ),
    )(x_flat, w_qkv)
    q, k, v = (a[:rows].reshape(B, S_p, dp) for a in qkv)

    # ---- kernel 2: per-batch resident-K/V attention, online softmax --------
    # VMEM budget: double-buffered resident K+V + Q/O blocks + f32 scratch.
    kv_resident = 2 * 2 * S_p * dp * qkv_item
    qo_blocks = 2 * blk_q * dp * (qkv_item + x_item)
    scratch = (blk_q * dp + 2 * blk_q * _LANE) * 4
    vmem_limit = int(min(64 * 1024 * 1024,
                         max(32 * 1024 * 1024,
                             1.5 * (kv_resident + qo_blocks + scratch))))
    # TODO(synk): for very long sequences where resident bf16 K/V exceeds the
    # per-generation VMEM budget (~48 MiB on v7x), fall back to streaming K/V
    # over a third grid axis with larger kv tiles.

    out = pl.pallas_call(
        functools.partial(_flash_attn_kernel, blk_kv=blk_kv, kv_valid=S),
        out_shape=jax.ShapeDtypeStruct((B, S_p, dp), x.dtype),
        grid_spec=pltpu.PrefetchScalarGridSpec(
            num_scalar_prefetch=0,
            grid=(B, n_q),
            in_specs=[
                pl.BlockSpec((None, blk_q, dp), lambda b, qi: (b, qi, 0)),
                # Full-sequence K/V blocks with index constant across q tiles:
                # DMA'd once per batch, resident in VMEM for all q tiles.
                pl.BlockSpec((None, S_p, dp), lambda b, qi: (b, 0, 0)),
                pl.BlockSpec((None, S_p, dp), lambda b, qi: (b, 0, 0)),
            ],
            out_specs=pl.BlockSpec((None, blk_q, dp), lambda b, qi: (b, qi, 0)),
            scratch_shapes=[
                pltpu.VMEM((blk_q, 1), jnp.float32),    # running max  m
                pltpu.VMEM((blk_q, 1), jnp.float32),    # running sum  l
                pltpu.VMEM((blk_q, dp), jnp.float32),   # f32 accumulator
            ],
        ),
        compiler_params=pltpu.CompilerParams(
            dimension_semantics=("parallel", "parallel"),
            vmem_limit_bytes=vmem_limit,
        ),
        cost_estimate=pl.CostEstimate(
            flops=4 * B * S_p * S_p * dp,
            transcendentals=B * S_p * S_p,
            # Resident layout: Q, K, V each read once per batch; O written once.
            bytes_accessed=(3 * B * S_p * dp * qkv_item
                            + B * S_p * dp * x_item),
        ),
    )(q, k, v)

    return out[:, :S, :d_out]


def _reference(x, w_q, w_k, w_v):
    q = x @ w_q
    k = x @ w_k
    v = x @ w_v
    scores = jnp.einsum("bqd,bkd->bqk", q, k)
    weights = jax.nn.softmax(scores / math.sqrt(k.shape[-1]), axis=-1)
    return jnp.einsum("bqk,bkd->bqd", weights, v)


if __name__ == "__main__":
    # --- chapter shapes: B=2, S=6, d_in=3, d_out=2 ---------------------------
    d_in, d_out = 3, 2
    inputs = jnp.array(
        [[0.43, 0.15, 0.89],
         [0.55, 0.87, 0.66],
         [0.57, 0.85, 0.64],
         [0.22, 0.58, 0.33],
         [0.77, 0.25, 0.10],
         [0.05, 0.80, 0.55]], dtype=jnp.float32)
    batch = jnp.stack((inputs, inputs), axis=0)               # (2, 6, 3)

    key = jax.random.PRNGKey(0)
    kq, kk, kv, kx, k2q, k2k, k2v = jax.random.split(key, 7)
    bound = 1.0 / math.sqrt(d_in)                             # torch Linear init range
    w_q = jax.random.uniform(kq, (d_in, d_out), jnp.float32, -bound, bound)
    w_k = jax.random.uniform(kk, (d_in, d_out), jnp.float32, -bound, bound)
    w_v = jax.random.uniform(kv, (d_in, d_out), jnp.float32, -bound, bound)

    ref = _reference(batch, w_q, w_k, w_v)

    # f32 intermediates: tight semantic check of the forward pass.
    out_f32 = jax.block_until_ready(
        self_attention_v2(batch, w_q, w_k, w_v, qkv_dtype=jnp.float32))
    assert out_f32.shape == (2, 6, d_out)
    assert jnp.allclose(out_f32, ref, atol=5e-3, rtol=5e-3), float(
        jnp.max(jnp.abs(out_f32 - ref)))

    # Default (bf16 intermediates) performance path: bf16-level tolerance.
    out_bf16 = jax.block_until_ready(self_attention_v2(batch, w_q, w_k, w_v))
    assert out_bf16.shape == (2, 6, d_out)
    assert jnp.allclose(out_bf16, ref, atol=2e-2, rtol=2e-2), float(
        jnp.max(jnp.abs(out_bf16 - ref)))

    # --- second case: decoupled q/kv tiles, in-kernel kv loop, tail masking --
    B2, S2, d_in2, d_out2 = 2, 40, 8, 16
    x2 = jax.random.uniform(kx, (B2, S2, d_in2), jnp.float32)
    b2 = 1.0 / math.sqrt(d_in2)
    w_q2 = jax.random.uniform(k2q, (d_in2, d_out2), jnp.float32, -b2, b2)
    w_k2 = jax.random.uniform(k2k, (d_in2, d_out2), jnp.float32, -b2, b2)
    w_v2 = jax.random.uniform(k2v, (d_in2, d_out2), jnp.float32, -b2, b2)
    out2 = jax.block_until_ready(
        self_attention_v2(x2, w_q2, w_k2, w_v2,
                          q_tile=8, kv_tile=16, row_tile=32))
    ref2 = _reference(x2, w_q2, w_k2, w_v2)
    assert out2.shape == (B2, S2, d_out2)
    assert jnp.allclose(out2, ref2, atol=2e-2, rtol=2e-2), float(
        jnp.max(jnp.abs(out2 - ref2)))

    print("KERNEL_OK")
</pallas_src>

<mosaic_0001>
module attributes {stable_mosaic.version = 11 : i64} {
  func.func @_qkv_proj_kernel(%arg0: i32, %arg1: memref<16x3xf32, #tpu.memory_space<vmem>>, %arg2: memref<3x384xf32, #tpu.memory_space<vmem>>, %arg3: memref<16x128xf32, #tpu.memory_space<vmem>>, %arg4: memref<16x128xf32, #tpu.memory_space<vmem>>, %arg5: memref<16x128xf32, #tpu.memory_space<vmem>>) attributes {dimension_semantics = [#tpu.dimension_semantics<parallel>], iteration_bounds = array<i64: 1>, scalar_prefetch = 0 : i64, scratch_operands = 0 : i64, tpu.core_type = #tpu.core_type<tc>, window_params = [{transform_indices = @transform_0, window_bounds = array<i64: 16, 3>}, {pipeline_mode = #tpu.pipeline_mode<synchronous>, transform_indices = @transform_1, window_bounds = array<i64: 3, 384>}, {transform_indices = @transform_2, window_bounds = array<i64: 16, 128>}, {transform_indices = @transform_3, window_bounds = array<i64: 16, 128>}, {transform_indices = @transform_4, window_bounds = array<i64: 16, 128>}]} {
    %c0 = arith.constant 0 : index
    %c0_0 = arith.constant 0 : index
    %0 = vector.load %arg1[%c0, %c0_0] : memref<16x3xf32, #tpu.memory_space<vmem>>, vector<16x3xf32>
    %c0_1 = arith.constant 0 : index
    %c0_2 = arith.constant 0 : index
    %1 = vector.load %arg2[%c0_1, %c0_2] : memref<3x384xf32, #tpu.memory_space<vmem>>, vector<3x384xf32>
    %cst = arith.constant dense<0.000000e+00> : vector<16x384xf32>
    %2 = tpu.matmul %0, %1, %cst {dimension_numbers = #tpu.dot_dimension_numbers<[1], [0], [0], [1], [0, 0, 1, 1], [], []>} : vector<16x3xf32>, vector<3x384xf32>, vector<16x384xf32> -> vector<16x384xf32>
    %3 = vector.extract_strided_slice %2 {offsets = [0, 0], sizes = [16, 128], strides = [1, 1]} : vector<16x384xf32> to vector<16x128xf32>
    %cst_3 = arith.constant 0.707106769 : f32
    %4 = vector.broadcast %cst_3 : f32 to vector<16x128xf32>
    %5 = arith.mulf %3, %4 : vector<16x128xf32>
    %c0_4 = arith.constant 0 : index
    %c0_5 = arith.constant 0 : index
    %6 = vector.load %arg3[%c0_4, %c0_5] : memref<16x128xf32, #tpu.memory_space<vmem>>, vector<16x128xf32>
    tpu.vector_store %arg3[%c0_4, %c0_5], %5 {strides = array<i32>} : memref<16x128xf32, #tpu.memory_space<vmem>>, vector<16x128xf32>,
    %7 = vector.extract_strided_slice %2 {offsets = [0, 128], sizes = [16, 128], strides = [1, 1]} : vector<16x384xf32> to vector<16x128xf32>
    %c0_6 = arith.constant 0 : index
    %c0_7 = arith.constant 0 : index
    %8 = vector.load %arg4[%c0_6, %c0_7] : memref<16x128xf32, #tpu.memory_space<vmem>>, vector<16x128xf32>
    tpu.vector_store %arg4[%c0_6, %c0_7], %7 {strides = array<i32>} : memref<16x128xf32, #tpu.memory_space<vmem>>, vector<16x128xf32>,
    %9 = vector.extract_strided_slice %2 {offsets = [0, 256], sizes = [16, 128], strides = [1, 1]} : vector<16x384xf32> to vector<16x128xf32>
    %c0_8 = arith.constant 0 : index
    %c0_9 = arith.constant 0 : index
    %10 = vector.load %arg5[%c0_8, %c0_9] : memref<16x128xf32, #tpu.memory_space<vmem>>, vector<16x128xf32>
    tpu.vector_store %arg5[%c0_8, %c0_9], %9 {strides = array<i32>} : memref<16x128xf32, #tpu.memory_space<vmem>>, vector<16x128xf32>,
    return
  }
  func.func @transform_0(%arg0: i32) -> (i32, i32) {
    %c0_i32 = arith.constant 0 : i32
    %c0_i32_0 = arith.constant 0 : i32
    return %arg0, %c0_i32 : i32, i32
  }
  func.func @transform_1(%arg0: i32) -> (i32, i32) {
    %c0_i32 = arith.constant 0 : i32
    %c0_i32_0 = arith.constant 0 : i32
    %c0_i32_1 = arith.constant 0 : i32
    return %c0_i32, %c0_i32_0 : i32, i32
  }
  func.func @transform_2(%arg0: i32) -> (i32, i32) {
    %c0_i32 = arith.constant 0 : i32
    %c0_i32_0 = arith.constant 0 : i32
    return %arg0, %c0_i32 : i32, i32
  }
  func.func @transform_3(%arg0: i32) -> (i32, i32) {
    %c0_i32 = arith.constant 0 : i32
    %c0_i32_0 = arith.constant 0 : i32
    return %arg0, %c0_i32 : i32, i32
  }
  func.func @transform_4(%arg0: i32) -> (i32, i32) {
    %c0_i32 = arith.constant 0 : i32
    %c0_i32_0 = arith.constant 0 : i32
    return %arg0, %c0_i32 : i32, i32
  }
}

</mosaic_0001>

<llo_original>
// kernel: tpu_custom_call.1
$region0: #{tpu_custom_call.1}
  #allocation0 [shape = 'u32[]', space=smem, size = 0x4, offset = 0x4, fixed_abs, tag = 'smem constant byte address 0x4 - core index']
  #allocation1 [shape = 'u32[72,128]{1,0:T(1,128)}', space=vmem, size = 0x9000, scoped, tag = 'internal scratch']
  %s0 = inlined_call_operand.vmem [shape: f32[16,3], index: 0, kind: input, shape index: {}]
  %s1 = inlined_call_operand.vmem [shape: f32[3,384], index: 1, kind: input, shape index: {}]
  %s2 = inlined_call_operand.hbm [shape: f32[16,128], index: 2, kind: output, shape index: {0}]
  %s3 = inlined_call_operand.hbm [shape: f32[16,128], index: 3, kind: output, shape index: {1}]
  %s4 = inlined_call_operand.hbm [shape: f32[16,128], index: 4, kind: output, shape index: {2}]
  %5 = xla_tuple %s2, %s3, %s4
  %s6 = sld [smem:[#allocation0]]
  $region34: #{tpu_custom_call.1} parent=0
    _
  %s8 = ssub.s32 1, %s6
  %s9 = scalar_select 0, %s8, %s6
  $region1: #{tpu_custom_call.1} parent=0
    #allocation2 [shape = 'u8[8192]{0}', space=vmem, size = 0x2000, scoped, tag = 'output window, operand 0, single buffered']
    #allocation3 [shape = 's32[1]{0}', space=sflag, size = 0x4, scoped, tag = 'scoped memory for tpu_custom_call.1']
    #allocation4 [shape = 'u8[8192]{0}', space=vmem, size = 0x2000, scoped, tag = 'output window, operand 1, single buffered']
    #allocation5 [shape = 's32[1]{0}', space=sflag, size = 0x4, scoped, tag = 'scoped memory for tpu_custom_call.1']
    #allocation6 [shape = 'u8[8192]{0}', space=vmem, size = 0x2000, scoped, tag = 'output window, operand 2, single buffered']
    %10 = vsyncpa [#allocation3], 0
    %11 = vsyncpa [#allocation5], 0
    // Predicated region
    $region2: #{tpu_custom_call.1} parent=1 // pred_check
      _
    $region3: #{tpu_custom_call.1} parent=1 // pred_check_branch
      %13 = sbr.rel (0) target = $region5
    $region4: #{tpu_custom_call.1} parent=1 // pred_region
      _
    $region5: #{tpu_custom_call.1} parent=1 // pred_fallthru
      _
    // Predicated region
    $region6: #{tpu_custom_call.1} parent=1 // pred_check
      _
    $region7: #{tpu_custom_call.1} parent=1 // pred_check_branch
      %15 = sbr.rel (0) target = $region9
    $region8: #{tpu_custom_call.1} parent=1 // pred_region
      _
    $region9: #{tpu_custom_call.1} parent=1 // pred_fallthru
      _
    %v16 = vld [vmem:[%s0] sm:$0xff]
    %v17 = vld [vmem:[%s0 + $0x8] sm:$0xff]
    %v18 = vld [vmem:[%s1] sm:$0x77]
    %v19 = vld [vmem:[%s1 + $0x8] sm:$0x7]
    %22 = vst [vmem:[#allocation1] ss:$2 sm:$0xff] %v18
    %s23 = scalar_lea.vmem [#allocation1], 16
    %24 = vst [vmem:[%s23] ss:$2 sm:$0xff] %v19
    %v25 = vld.sshfl [vmem:[#allocation1] sm:$0xff pattern:$0x75316420]
    %v26 = vld.sshfl [vmem:[#allocation1 + $0x8] sm:$0xff pattern:$0x75316420]
    %v27 = vld.sshfl [vmem:[#allocation1 + $0x10] sm:$0xff pattern:$0x75316420]
    %vm28 = vcmask 23552
    %v30 = vsel %vm28, %v16, 0
    %v33 = vsel %vm28, %v17, 0
    %vm35 = vcmask 1042432
    %v36 = vsel %vm35, %v25, 0
    %v38 = vsel %vm35, %v26, 0
    %v40 = vsel %vm35, %v27, 0
    %42 = vmatpush.msra.mxu0 0.0
    %43 = vmatpush.msra.mxu0 0.0
    %44 = vmatpush.msra.mxu0 0.0
    %45 = vmatpush.msra.mxu0 0.0
    %46 = vmatpush.msra.mxu0 0.0
    %47 = vmatpush.msra.mxu0 0.0
    %48 = vmatpush.msra.mxu0 0.0
    %49 = vmatpush.msra.mxu0 0.0
    %50 = vmatpush.msra.mxu0 0.0
    %51 = vmatpush.msra.mxu0 0.0
    %52 = vmatpush.msra.mxu0 0.0
    %53 = vmatpush.msra.mxu0 0.0
    %54 = vmatpush.msra.mxu0 0.0
    %55 = vmatpush.msra.mxu0 0.0
    %56 = vmatpush.msra.mxu0 0.0
    %57 = vmatpush.msra.mxu0 %v36
    %58 = vmatmul.f32.gmra.mxu0 %v30
    %v59 = vpop.f32.mrf.mxu0
    %v60 = vadd.f32 0.0, %v59
    %61 = vmatmul.f32.gmra.mxu0 %v33
    %v62 = vpop.f32.mrf.mxu0
    %v63 = vadd.f32 0.0, %v62
    %64 = vdwg.mxu0
    %65 = vmatpush.msra.mxu0 0.0
    %66 = vmatpush.msra.mxu0 0.0
    %67 = vmatpush.msra.mxu0 0.0
    %68 = vmatpush.msra.mxu0 0.0
    %69 = vmatpush.msra.mxu0 0.0
    %70 = vmatpush.msra.mxu0 0.0
    %71 = vmatpush.msra.mxu0 0.0
    %72 = vmatpush.msra.mxu0 0.0
    %73 = vmatpush.msra.mxu0 0.0
    %74 = vmatpush.msra.mxu0 0.0
    %75 = vmatpush.msra.mxu0 0.0
    %76 = vmatpush.msra.mxu0 0.0
    %77 = vmatpush.msra.mxu0 0.0
    %78 = vmatpush.msra.mxu0 0.0
    %79 = vmatpush.msra.mxu0 0.0
    %80 = vmatpush.msra.mxu0 %v38
    %81 = vmatmul.f32.gmra.mxu0 %v30
    %v82 = vpop.f32.mrf.mxu0
    %v83 = vadd.f32 0.0, %v82
    %84 = vmatmul.f32.gmra.mxu0 %v33
    %v85 = vpop.f32.mrf.mxu0
    %v86 = vadd.f32 0.0, %v85
    %87 = vdwg.mxu0
    %88 = vmatpush.msra.mxu0 0.0
    %89 = vmatpush.msra.mxu0 0.0
    %90 = vmatpush.msra.mxu0 0.0
    %91 = vmatpush.msra.mxu0 0.0
    %92 = vmatpush.msra.mxu0 0.0
    %93 = vmatpush.msra.mxu0 0.0
    %94 = vmatpush.msra.mxu0 0.0
    %95 = vmatpush.msra.mxu0 0.0
    %96 = vmatpush.msra.mxu0 0.0
    %97 = vmatpush.msra.mxu0 0.0
    %98 = vmatpush.msra.mxu0 0.0
    %99 = vmatpush.msra.mxu0 0.0
    %100 = vmatpush.msra.mxu0 0.0
    %101 = vmatpush.msra.mxu0 0.0
    %102 = vmatpush.msra.mxu0 0.0
    %103 = vmatpush.msra.mxu0 %v40
    %104 = vmatmul.f32.gmra.mxu0 %v30
    %v105 = vpop.f32.mrf.mxu0
    %v106 = vadd.f32 0.0, %v105
    %107 = vmatmul.f32.gmra.mxu0 %v33
    %v108 = vpop.f32.mrf.mxu0
    %v109 = vadd.f32 0.0, %v108
    %110 = vdwg.mxu0
    %v111 = vmul.f32 %v60, 0.70710677
    %v112 = vmul.f32 %v63, 0.70710677
    %113 = vst [vmem:[#allocation2] sm:$0xff] %v111
    %114 = vst [vmem:[#allocation2 + $0x8] sm:$0xff] %v112
    %115 = vst [vmem:[#allocation4] sm:$0xff] %v83
    %116 = vst [vmem:[#allocation4 + $0x8] sm:$0xff] %v86
    %117 = vst [vmem:[#allocation6] sm:$0xff] %v106
    %118 = vst [vmem:[#allocation6 + $0x8] sm:$0xff] %v109
    // Predicated region
    $region10: #{tpu_custom_call.1} parent=1 // pred_check
      _
    $region11: #{tpu_custom_call.1} parent=1 // pred_check_branch
      %120 = sbr.rel (0) target = $region13
    $region12: #{tpu_custom_call.1} parent=1 // pred_region
      %122 = vsyncadd [#allocation3], 0
      %s123 = sshll.u32 [#allocation2], 4
      %s124 = int_to_ptr.vmem [resolvable:$true] %s123
      %s125 = sshll.u32 %s2, 4
      %s126 = int_to_ptr.hbm [resolvable:$true] %s125
      %131 = dma.vmem_to_hbm [thread:$0]  %s124, 256, %s126, [#allocation3], 128, 128, 8
    $region13: #{tpu_custom_call.1} parent=1 // pred_fallthru
      _
    // Predicated region
    $region14: #{tpu_custom_call.1} parent=1 // pred_check
      _
    $region15: #{tpu_custom_call.1} parent=1 // pred_check_branch
      %133 = sbr.rel (0) target = $region17
    $region16: #{tpu_custom_call.1} parent=1 // pred_region
      %135 = vsyncadd [#allocation5], 0
      %s136 = sshll.u32 [#allocation4], 4
      %s137 = int_to_ptr.vmem [resolvable:$true] %s136
      %s138 = sshll.u32 %s3, 4
      %s139 = int_to_ptr.hbm [resolvable:$true] %s138
      %144 = dma.vmem_to_hbm [thread:$0]  %s137, 256, %s139, [#allocation5], 128, 128, 8
    $region17: #{tpu_custom_call.1} parent=1 // pred_fallthru
      _
    // Predicated region
    $region18: #{tpu_custom_call.1} parent=1 // pred_check
      _
    $region19: #{tpu_custom_call.1} parent=1 // pred_check_branch
      %146 = sbr.rel (0) target = $region21
    $region20: #{tpu_custom_call.1} parent=1 // pred_region
      %148 = vsyncadd [#allocation5], 0
      %s149 = sshll.u32 [#allocation6], 4
      %s150 = int_to_ptr.vmem [resolvable:$true] %s149
      %s151 = sshll.u32 %s4, 4
      %s152 = int_to_ptr.hbm [resolvable:$true] %s151
      %157 = dma.vmem_to_hbm [thread:$0]  %s150, 256, %s152, [#allocation5], 128, 128, 8
    $region21: #{tpu_custom_call.1} parent=1 // pred_fallthru
      _
    // Predicated region
    $region22: #{tpu_custom_call.1} parent=1 // pred_check
      _
    $region23: #{tpu_custom_call.1} parent=1 // pred_check_branch
      %159 = sbr.rel (0) target = $region25
    $region24: #{tpu_custom_call.1} parent=1 // pred_region
      %161 = dma.done [#allocation3], 256
    $region25: #{tpu_custom_call.1} parent=1 // pred_fallthru
      _
    // Predicated region
    $region26: #{tpu_custom_call.1} parent=1 // pred_check
      _
    $region27: #{tpu_custom_call.1} parent=1 // pred_check_branch
      %163 = sbr.rel (0) target = $region29
    $region28: #{tpu_custom_call.1} parent=1 // pred_region
      %165 = dma.done [#allocation5], 256
    $region29: #{tpu_custom_call.1} parent=1 // pred_fallthru
      _
    // Predicated region
    $region30: #{tpu_custom_call.1} parent=1 // pred_check
      _
    $region31: #{tpu_custom_call.1} parent=1 // pred_check_branch
      %167 = sbr.rel (0) target = $region33
    $region32: #{tpu_custom_call.1} parent=1 // pred_region
      %169 = dma.done [#allocation5], 256
    $region33: #{tpu_custom_call.1} parent=1 // pred_fallthru
      _
    %170 = vsyncpa [#allocation3], 1
    %171 = vsyncpa [#allocation5], 1

</llo_original>
